<compile_context>
chip_gen: v7x
topology: tpu7x:2x2x1
jax: 0.10.0
libtpu: 0.0.40
codegen_flags: <defaults>
</compile_context>

<pallas_src>
import math

import jax
import jax.numpy as jnp
from jax.experimental import pallas as pl
from jax.experimental.pallas import tpu as pltpu


def _copy_kernel(x_ref, o_ref):
    # Pure data movement: full-tile VMEM load -> VMEM store (identity).
    o_ref[...] = x_ref[...]


# Per-tile VMEM budget for the copy.  With separate in/out tiles and 2-deep
# double buffering the pipeline uses ~4x this (~8 MiB), which fits the default
# scoped VMEM limit on every generation (v5e: 16 MiB, v6e/v7x: 32 MiB).
_TILE_BYTES = 2 * 1024 * 1024
# Hard ceiling for the un-tiled single-block fallback (tiny ragged slabs only).
_SINGLE_BLOCK_BYTES = 4 * 1024 * 1024
_LANE_CHOICES = (1024, 512, 256, 128)


def view_forward(x, view_shape, *, materialize=True, donate=False):
    """Pallas equivalent of View(view_shape)(x).

    out = x.reshape(*x.shape[:-1], *view_shape)

    materialize=False (or shapes where a lane-dense slab cannot be formed)
    returns the metadata-only reshape -- the optimal path for a pure view.
    materialize=True routes the bytes through the tiled Pallas copy kernel.
    donate=True additionally aliases the output buffer onto the input
    (legal for view semantics), halving HBM traffic of the copy.
    """
    batch_dims = x.shape[:-1]
    last = x.shape[-1]
    if math.prod(view_shape) != last:
        raise ValueError(
            f"last dim {last} must equal prod(view shape) {math.prod(view_shape)}")
    out_shape = (*batch_dims, *view_shape)

    total = math.prod(x.shape) if x.shape else 1
    itemsize = jnp.dtype(x.dtype).itemsize

    # Metadata-only fast path (also the fallback when the element count is not
    # a multiple of 128, where a lane-dense tiled slab is not expressible).
    if not materialize or total == 0 or total % 128 != 0:
        return x.reshape(out_shape)

    # Lane-dense slab: widest lane width (multiple of 128) dividing the element
    # count, so every store is a full, unmasked 128-lane vst.
    lane = next(l for l in _LANE_CHOICES if total % l == 0)
    rows = total // lane

    if rows >= 8 and rows % 8 == 0:
        # Tiled, auto-pipelined copy over the row axis (row count multiple of 8
        # -> block shape satisfies the (8,128) layout constraint).
        tile_r = max(8, min(rows, (_TILE_BYTES // (lane * itemsize)) // 8 * 8))
        grid = (pl.cdiv(rows, tile_r),)
        block = (tile_r, lane)
    elif rows * lane * itemsize <= _SINGLE_BLOCK_BYTES:
        # Tiny / ragged slab: a single full-array block is always layout-legal.
        grid = (1,)
        block = (rows, lane)
    else:
        # Large slab whose row count is not a multiple of 8: a single block
        # would blow VMEM and a partial block violates (8,128).  A view has no
        # math anyway -- metadata-only reshape is the correct (and fastest) path.
        return x.reshape(out_shape)

    slab = x.reshape(rows, lane)   # glue: layout only

    y = pl.pallas_call(
        _copy_kernel,
        out_shape=jax.ShapeDtypeStruct((rows, lane), x.dtype),
        grid=grid,
        in_specs=[pl.BlockSpec(block, lambda i: (i, 0))],
        out_specs=pl.BlockSpec(block, lambda i: (i, 0)),
        compiler_params=pltpu.CompilerParams(
            # Row axis is independent -> shard across both TCs on v7x.
            dimension_semantics=("parallel",)),
        input_output_aliases=({0: 0} if donate else {}),
    )(slab)

    # Glue: the actual view (metadata only).
    return y.reshape(out_shape)


if __name__ == "__main__":
    key = jax.random.PRNGKey(0)
    # Input (2, 4, 64); View shape (8, 8) -> output (2, 4, 8, 8).
    x = jax.random.normal(key, (2, 4, 64), dtype=jnp.float32)
    view_shape = (8, 8)

    out = view_forward(x, view_shape, materialize=True)
    out = jax.block_until_ready(out)

    # Reference check against plain jnp reshape (same semantics as torch.view).
    ref = x.reshape(*x.shape[:-1], *view_shape)
    assert out.shape == (2, 4, 8, 8), out.shape
    assert out.dtype == x.dtype
    assert jnp.array_equal(out, ref), "mismatch vs reference reshape"

    # Also exercise the (8,128)-tiled multi-row path with a larger slab.
    x2 = jax.random.normal(jax.random.PRNGKey(1), (8, 16, 128), dtype=jnp.float32)
    out2 = jax.block_until_ready(view_forward(x2, (8, 16)))
    assert out2.shape == (8, 16, 8, 16)
    assert jnp.array_equal(out2, x2.reshape(8, 16, 8, 16))

    # Ragged slab (rows not a multiple of 8) -> single-block path.
    x3 = jax.random.normal(jax.random.PRNGKey(2), (3, 3, 128), dtype=jnp.float32)
    out3 = jax.block_until_ready(view_forward(x3, (2, 64)))
    assert out3.shape == (3, 3, 2, 64)
    assert jnp.array_equal(out3, x3.reshape(3, 3, 2, 64))

    # Metadata-only (no-kernel) path, the recommended default for a pure view.
    out4 = jax.block_until_ready(view_forward(x, view_shape, materialize=False))
    assert jnp.array_equal(out4, ref)

    print("KERNEL_OK")
</pallas_src>

<mosaic_0001>
module attributes {stable_mosaic.version = 11 : i64} {
  func.func @_copy_kernel(%arg0: i32, %arg1: memref<1x512xf32, #tpu.memory_space<vmem>>, %arg2: memref<1x512xf32, #tpu.memory_space<vmem>>) attributes {dimension_semantics = [#tpu.dimension_semantics<parallel>], iteration_bounds = array<i64: 1>, scalar_prefetch = 0 : i64, scratch_operands = 0 : i64, tpu.core_type = #tpu.core_type<tc>, window_params = [{transform_indices = @transform_0, window_bounds = array<i64: 1, 512>}, {transform_indices = @transform_1, window_bounds = array<i64: 1, 512>}]} {
    %c0 = arith.constant 0 : index
    %c0_0 = arith.constant 0 : index
    %0 = vector.load %arg1[%c0, %c0_0] : memref<1x512xf32, #tpu.memory_space<vmem>>, vector<1x512xf32>
    %c0_1 = arith.constant 0 : index
    %c0_2 = arith.constant 0 : index
    %1 = vector.load %arg2[%c0_1, %c0_2] : memref<1x512xf32, #tpu.memory_space<vmem>>, vector<1x512xf32>
    tpu.vector_store %arg2[%c0_1, %c0_2], %0 {strides = array<i32>} : memref<1x512xf32, #tpu.memory_space<vmem>>, vector<1x512xf32>,
    return
  }
  func.func @transform_0(%arg0: i32) -> (i32, i32) {
    %c0_i32 = arith.constant 0 : i32
    %c0_i32_0 = arith.constant 0 : i32
    return %arg0, %c0_i32 : i32, i32
  }
  func.func @transform_1(%arg0: i32) -> (i32, i32) {
    %c0_i32 = arith.constant 0 : i32
    %c0_i32_0 = arith.constant 0 : i32
    return %arg0, %c0_i32 : i32, i32
  }
}

</mosaic_0001>

<llo_original>
// kernel: tpu_custom_call.1
$region0: #{tpu_custom_call.1}
  #allocation0 [shape = 'u32[]', space=smem, size = 0x4, offset = 0x4, fixed_abs, tag = 'smem constant byte address 0x4 - core index']
  #allocation1 [shape = 'u32[144,128]{1,0:T(1,128)}', space=vmem, size = 0x12000, scoped, tag = 'internal scratch']
  %s0 = inlined_call_operand.hbm [shape: f32[1,512], index: 0, kind: input, shape index: {}]
  %s1 = inlined_call_operand.hbm [shape: f32[1,512], index: 1, kind: output, shape index: {}]
  %s2 = sld [smem:[#allocation0]]
  $region18: #{tpu_custom_call.1} parent=0
    _
  %s4 = ssub.s32 1, %s2
  %s5 = scalar_select 0, %s4, %s2
  $region1: #{tpu_custom_call.1} parent=0
    #allocation2 [shape = 'u8[2048]{0}', space=vmem, size = 0x800, scoped, tag = 'input window, operand 0, single buffered']
    #allocation3 [shape = 's32[1]{0}', space=sflag, size = 0x4, scoped, tag = 'scoped memory for tpu_custom_call.1']
    #allocation4 [shape = 's32[1]{0}', space=sflag, size = 0x4, scoped, tag = 'scoped memory for tpu_custom_call.1']
    #allocation5 [shape = 'u8[2048]{0}', space=vmem, size = 0x800, scoped, tag = 'output window, operand 0, single buffered']
    %6 = vsyncpa [#allocation3], 0
    %7 = vsyncpa [#allocation4], 0
    // Predicated region
    $region2: #{tpu_custom_call.1} parent=1 // pred_check
      _
    $region3: #{tpu_custom_call.1} parent=1 // pred_check_branch
      %9 = sbr.rel (0) target = $region5
    $region4: #{tpu_custom_call.1} parent=1 // pred_region
      %s11 = ssub.s32 64, 64
      %12 = vsyncadd [#allocation3], %s11
      %s14 = sshll.u32 [#allocation2], 4
      %s15 = int_to_ptr.vmem [resolvable:$true] %s14
      %17 = dma.hbm_to_vmem [thread:$0]  %s0, 64, %s15, [#allocation3]
    $region5: #{tpu_custom_call.1} parent=1 // pred_fallthru
      _
    // Predicated region
    $region6: #{tpu_custom_call.1} parent=1 // pred_check
      _
    $region7: #{tpu_custom_call.1} parent=1 // pred_check_branch
      %19 = sbr.rel (0) target = $region9
    $region8: #{tpu_custom_call.1} parent=1 // pred_region
      %20 = dma.done [#allocation3], 64
    $region9: #{tpu_custom_call.1} parent=1 // pred_fallthru
      _
    %v21 = vld [vmem:[#allocation2] sm:$0xf]
    %v22 = vlaneseq
    %vm23 = vcmp.ge.s32.totalorder %v22, 0
    %vm24 = vcmp.lt.s32.totalorder %v22, 512
    %vm25 = vmand %vm23, %vm24
    %26 = vst.msk [vmem:[#allocation5] sm:$0xf] %vm25, %v21
    // Predicated region
    $region10: #{tpu_custom_call.1} parent=1 // pred_check
      _
    $region11: #{tpu_custom_call.1} parent=1 // pred_check_branch
      %28 = sbr.rel (0) target = $region13
    $region12: #{tpu_custom_call.1} parent=1 // pred_region
      %s30 = ssub.s32 64, 64
      %31 = vsyncadd [#allocation4], %s30
      %s33 = sshll.u32 [#allocation5], 4
      %s34 = int_to_ptr.vmem [resolvable:$true] %s33
      %36 = dma.vmem_to_hbm [thread:$0]  %s34, 64, %s1, [#allocation4]
    $region13: #{tpu_custom_call.1} parent=1 // pred_fallthru
      _
    // Predicated region
    $region14: #{tpu_custom_call.1} parent=1 // pred_check
      _
    $region15: #{tpu_custom_call.1} parent=1 // pred_check_branch
      %38 = sbr.rel (0) target = $region17
    $region16: #{tpu_custom_call.1} parent=1 // pred_region
      %39 = dma.done [#allocation4], 64
    $region17: #{tpu_custom_call.1} parent=1 // pred_fallthru
      _
    %40 = vsyncpa [#allocation3], 1
    %41 = vsyncpa [#allocation4], 1

</llo_original>
